<compile_context>
chip_gen: v7x
topology: tpu7x:2x2x1
jax: 0.10.0
libtpu: 0.0.40
codegen_flags: <defaults>
</compile_context>

<pallas_src>
import functools

import jax
import jax.numpy as jnp
from jax import lax
from jax.experimental import pallas as pl
from jax.experimental.pallas import tpu as pltpu


def mlp_kernel(x_ref,
               w1_ref, b1_ref,
               w2_ref, b2_ref,
               w3_ref, b3_ref,
               w4_ref, b4_ref,
               w5_ref, b5_ref,
               w6_ref, b6_ref,
               o_ref):
    # x_ref: [TB, num_inputs] f32.  Weights: [out, in] bf16.  Biases: [out, 1] f32.
    x = x_ref[...].astype(jnp.bfloat16)
    # Layer 1: contract x's feature axis directly -> feature-major [32, TB]
    # (equivalent to W1 @ x^T; avoids materializing a transpose of the tile).
    h = lax.dot_general(w1_ref[...], x, (((1,), (1,)), ((), ())),
                        preferred_element_type=jnp.float32)
    h = jnp.tanh(h + b1_ref[...])
    # Hidden layers 2..5: bf16 MXU matmul, f32 accumulate, f32 tanh.
    for w_ref, b_ref in ((w2_ref, b2_ref), (w3_ref, b3_ref),
                         (w4_ref, b4_ref), (w5_ref, b5_ref)):
        z = jnp.dot(w_ref[...], h.astype(jnp.bfloat16),
                    preferred_element_type=jnp.float32) + b_ref[...]
        h = jnp.tanh(z)
    # Output layer (no activation) -> lane-dense [num_outputs, TB] store.
    o_ref[...] = (jnp.dot(w6_ref[...], h.astype(jnp.bfloat16),
                          preferred_element_type=jnp.float32)
                  + b6_ref[...]).astype(o_ref.dtype)


def _round_up(n, m):
    return ((n + m - 1) // m) * m


def _choose_tile(batch, block_rows):
    """Batch-tile size: no pad-to-tile waste, lane-aligned, v7x-balanced."""
    if batch <= 256:
        # Single exact block: block dims == full array dims satisfies the
        # (8,128) layout rule with zero padding/waste.
        return batch
    steps = max(2, pl.cdiv(batch, block_rows))
    if steps % 2:          # even step count -> balanced across v7x's 2 TCs
        steps += 1
    # Multiple of 128 keeps the [num_outputs, tb] output block lane-aligned
    # (unmasked stores) and the [tb, num_inputs] input block sublane-aligned.
    return _round_up(pl.cdiv(batch, steps), 128)


@functools.partial(jax.jit, static_argnames=("block_rows",))
def _forward_impl(x, params, block_rows):
    B, num_inputs = x.shape

    # Prepare kernel-side parameter layout once (tiny ~85 KB total):
    #   W: [out, in] bf16 (MXU-native), b: [out, 1] f32 (broadcasts over lanes).
    flat_params = []
    for w, b in params:
        flat_params.append(w.astype(jnp.bfloat16))
        flat_params.append(b.reshape(-1, 1).astype(jnp.float32))
    num_outputs = flat_params[-2].shape[0]

    tb = _choose_tile(B, max(int(block_rows), 128))
    grid = (pl.cdiv(B, tb),)

    x_spec = pl.BlockSpec((tb, num_inputs), lambda i: (i, 0))
    # Feature-major output in HBM: [num_outputs, B]; tile the batch on lanes.
    out_spec = pl.BlockSpec((num_outputs, tb), lambda i: (0, i))
    # Params: full-array blocks, constant index_map -> loaded once, VMEM-resident.
    param_specs = [pl.BlockSpec(p.shape, lambda i: (0, 0)) for p in flat_params]

    weights = flat_params[0::2]
    flops = 2 * B * sum(int(w.shape[0] * w.shape[1]) for w in weights)
    transcendentals = B * sum(int(w.shape[0]) for w in weights[:-1])
    bytes_accessed = (B * (num_inputs + num_outputs) * 4
                      + sum(int(p.size) * p.dtype.itemsize for p in flat_params))

    out_t = pl.pallas_call(
        mlp_kernel,
        out_shape=jax.ShapeDtypeStruct((num_outputs, B), jnp.float32),
        grid=grid,
        in_specs=[x_spec] + param_specs,
        out_specs=out_spec,
        compiler_params=pltpu.CompilerParams(
            dimension_semantics=("parallel",)),   # megacore split on v7x
        cost_estimate=pl.CostEstimate(
            flops=flops,
            transcendentals=transcendentals,
            bytes_accessed=bytes_accessed),
    )(x, *flat_params)

    # Layout plumbing only: [num_outputs, B] -> [B, num_outputs].
    return out_t.T


def simple_classifier_forward(x, params, *, block_rows=2048):
    """x: [B, num_inputs] f32. params: list of (W [out, in], b [out]) in PyTorch layout."""
    return _forward_impl(x, tuple(tuple(p) for p in params), block_rows)


def init_params(key, num_inputs, num_outputs):
    """PyTorch-like nn.Linear init: uniform(-1/sqrt(fan_in), 1/sqrt(fan_in))."""
    dims = [num_inputs, 32, 64, 128, 64, 32, num_outputs]
    params = []
    for i in range(6):
        fan_in, fan_out = dims[i], dims[i + 1]
        key, kw, kb = jax.random.split(key, 3)
        bound = 1.0 / (fan_in ** 0.5)
        w = jax.random.uniform(kw, (fan_out, fan_in), jnp.float32, -bound, bound)
        b = jax.random.uniform(kb, (fan_out,), jnp.float32, -bound, bound)
        params.append((w, b))
    return params


def reference_forward(x, params):
    """Pure-JAX f32 reference matching the PyTorch forward."""
    h = x
    for i, (w, b) in enumerate(params):
        h = h @ w.T + b
        if i < len(params) - 1:
            h = jnp.tanh(h)
    return h


if __name__ == "__main__":
    key = jax.random.PRNGKey(0)
    k_x, k_p, k_big = jax.random.split(key, 3)

    batch, num_inputs, num_outputs = 8, 16, 4
    params = init_params(k_p, num_inputs, num_outputs)

    # Small batch: single exact block (block dims == array dims).
    x = jax.random.normal(k_x, (batch, num_inputs), jnp.float32)
    out = jax.block_until_ready(simple_classifier_forward(x, params))
    ref = reference_forward(x, params)
    assert out.shape == (batch, num_outputs)
    # bf16 matmul operands with f32 accumulation -> relaxed tolerance vs f32 ref.
    assert jnp.allclose(out, ref, atol=1e-2, rtol=1e-2), "mismatch (small batch)"

    # Larger ragged batch: 2-step grid with a partial final block (no wrapper pad).
    big_batch = 1030
    xb = jax.random.normal(k_big, (big_batch, num_inputs), jnp.float32)
    outb = jax.block_until_ready(simple_classifier_forward(xb, params))
    refb = reference_forward(xb, params)
    assert outb.shape == (big_batch, num_outputs)
    assert jnp.allclose(outb, refb, atol=1e-2, rtol=1e-2), "mismatch (large batch)"

    print("KERNEL_OK")
</pallas_src>

<mosaic_0001>
module attributes {stable_mosaic.version = 11 : i64} {
  func.func @mlp_kernel(%arg0: i32, %arg1: memref<8x16xf32, #tpu.memory_space<vmem>>, %arg2: memref<32x16xbf16, #tpu.memory_space<vmem>>, %arg3: memref<32x1xf32, #tpu.memory_space<vmem>>, %arg4: memref<64x32xbf16, #tpu.memory_space<vmem>>, %arg5: memref<64x1xf32, #tpu.memory_space<vmem>>, %arg6: memref<128x64xbf16, #tpu.memory_space<vmem>>, %arg7: memref<128x1xf32, #tpu.memory_space<vmem>>, %arg8: memref<64x128xbf16, #tpu.memory_space<vmem>>, %arg9: memref<64x1xf32, #tpu.memory_space<vmem>>, %arg10: memref<32x64xbf16, #tpu.memory_space<vmem>>, %arg11: memref<32x1xf32, #tpu.memory_space<vmem>>, %arg12: memref<4x32xbf16, #tpu.memory_space<vmem>>, %arg13: memref<4x1xf32, #tpu.memory_space<vmem>>, %arg14: memref<4x8xf32, #tpu.memory_space<vmem>>) attributes {dimension_semantics = [#tpu.dimension_semantics<parallel>], iteration_bounds = array<i64: 1>, scalar_prefetch = 0 : i64, scratch_operands = 0 : i64, tpu.core_type = #tpu.core_type<tc>, window_params = [{transform_indices = @transform_0, window_bounds = array<i64: 8, 16>}, {pipeline_mode = #tpu.pipeline_mode<synchronous>, transform_indices = @transform_1, window_bounds = array<i64: 32, 16>}, {pipeline_mode = #tpu.pipeline_mode<synchronous>, transform_indices = @transform_2, window_bounds = array<i64: 32, 1>}, {pipeline_mode = #tpu.pipeline_mode<synchronous>, transform_indices = @transform_3, window_bounds = array<i64: 64, 32>}, {pipeline_mode = #tpu.pipeline_mode<synchronous>, transform_indices = @transform_4, window_bounds = array<i64: 64, 1>}, {pipeline_mode = #tpu.pipeline_mode<synchronous>, transform_indices = @transform_5, window_bounds = array<i64: 128, 64>}, {pipeline_mode = #tpu.pipeline_mode<synchronous>, transform_indices = @transform_6, window_bounds = array<i64: 128, 1>}, {pipeline_mode = #tpu.pipeline_mode<synchronous>, transform_indices = @transform_7, window_bounds = array<i64: 64, 128>}, {pipeline_mode = #tpu.pipeline_mode<synchronous>, transform_indices = @transform_8, window_bounds = array<i64: 64, 1>}, {pipeline_mode = #tpu.pipeline_mode<synchronous>, transform_indices = @transform_9, window_bounds = array<i64: 32, 64>}, {pipeline_mode = #tpu.pipeline_mode<synchronous>, transform_indices = @transform_10, window_bounds = array<i64: 32, 1>}, {pipeline_mode = #tpu.pipeline_mode<synchronous>, transform_indices = @transform_11, window_bounds = array<i64: 4, 32>}, {pipeline_mode = #tpu.pipeline_mode<synchronous>, transform_indices = @transform_12, window_bounds = array<i64: 4, 1>}, {transform_indices = @transform_13, window_bounds = array<i64: 4, 8>}]} {
    %c0 = arith.constant 0 : index
    %c0_0 = arith.constant 0 : index
    %0 = vector.load %arg1[%c0, %c0_0] : memref<8x16xf32, #tpu.memory_space<vmem>>, vector<8x16xf32>
    %1 = arith.truncf %0 : vector<8x16xf32> to vector<8x16xbf16>
    %c0_1 = arith.constant 0 : index
    %c0_2 = arith.constant 0 : index
    %2 = vector.load %arg2[%c0_1, %c0_2] : memref<32x16xbf16, #tpu.memory_space<vmem>>, vector<32x16xbf16>
    %cst = arith.constant dense<0.000000e+00> : vector<32x8xf32>
    %3 = tpu.matmul %2, %1, %cst {dimension_numbers = #tpu.dot_dimension_numbers<[1], [1], [0], [0], [0, 0, 1, 0], [], []>} : vector<32x16xbf16>, vector<8x16xbf16>, vector<32x8xf32> -> vector<32x8xf32>
    %c0_3 = arith.constant 0 : index
    %c0_4 = arith.constant 0 : index
    %4 = vector.load %arg3[%c0_3, %c0_4] : memref<32x1xf32, #tpu.memory_space<vmem>>, vector<32x1xf32>
    %5 = vector.broadcast %4 : vector<32x1xf32> to vector<32x8xf32>
    %6 = arith.addf %3, %5 : vector<32x8xf32>
    %7 = math.tanh %6 : vector<32x8xf32>
    %c0_5 = arith.constant 0 : index
    %c0_6 = arith.constant 0 : index
    %8 = vector.load %arg4[%c0_5, %c0_6] : memref<64x32xbf16, #tpu.memory_space<vmem>>, vector<64x32xbf16>
    %9 = arith.truncf %7 : vector<32x8xf32> to vector<32x8xbf16>
    %cst_7 = arith.constant dense<0.000000e+00> : vector<64x8xf32>
    %10 = tpu.matmul %8, %9, %cst_7 {dimension_numbers = #tpu.dot_dimension_numbers<[1], [0], [0], [1], [0, 0, 1, 1], [], []>} : vector<64x32xbf16>, vector<32x8xbf16>, vector<64x8xf32> -> vector<64x8xf32>
    %c0_8 = arith.constant 0 : index
    %c0_9 = arith.constant 0 : index
    %11 = vector.load %arg5[%c0_8, %c0_9] : memref<64x1xf32, #tpu.memory_space<vmem>>, vector<64x1xf32>
    %12 = vector.broadcast %11 : vector<64x1xf32> to vector<64x8xf32>
    %13 = arith.addf %10, %12 : vector<64x8xf32>
    %14 = math.tanh %13 : vector<64x8xf32>
    %c0_10 = arith.constant 0 : index
    %c0_11 = arith.constant 0 : index
    %15 = vector.load %arg6[%c0_10, %c0_11] : memref<128x64xbf16, #tpu.memory_space<vmem>>, vector<128x64xbf16>
    %16 = arith.truncf %14 : vector<64x8xf32> to vector<64x8xbf16>
    %cst_12 = arith.constant dense<0.000000e+00> : vector<128x8xf32>
    %17 = tpu.matmul %15, %16, %cst_12 {dimension_numbers = #tpu.dot_dimension_numbers<[1], [0], [0], [1], [0, 0, 1, 1], [], []>} : vector<128x64xbf16>, vector<64x8xbf16>, vector<128x8xf32> -> vector<128x8xf32>
    %c0_13 = arith.constant 0 : index
    %c0_14 = arith.constant 0 : index
    %18 = vector.load %arg7[%c0_13, %c0_14] : memref<128x1xf32, #tpu.memory_space<vmem>>, vector<128x1xf32>
    %19 = vector.broadcast %18 : vector<128x1xf32> to vector<128x8xf32>
    %20 = arith.addf %17, %19 : vector<128x8xf32>
    %21 = math.tanh %20 : vector<128x8xf32>
    %c0_15 = arith.constant 0 : index
    %c0_16 = arith.constant 0 : index
    %22 = vector.load %arg8[%c0_15, %c0_16] : memref<64x128xbf16, #tpu.memory_space<vmem>>, vector<64x128xbf16>
    %23 = arith.truncf %21 : vector<128x8xf32> to vector<128x8xbf16>
    %cst_17 = arith.constant dense<0.000000e+00> : vector<64x8xf32>
    %24 = tpu.matmul %22, %23, %cst_17 {dimension_numbers = #tpu.dot_dimension_numbers<[1], [0], [0], [1], [0, 0, 1, 1], [], []>} : vector<64x128xbf16>, vector<128x8xbf16>, vector<64x8xf32> -> vector<64x8xf32>
    %c0_18 = arith.constant 0 : index
    %c0_19 = arith.constant 0 : index
    %25 = vector.load %arg9[%c0_18, %c0_19] : memref<64x1xf32, #tpu.memory_space<vmem>>, vector<64x1xf32>
    %26 = vector.broadcast %25 : vector<64x1xf32> to vector<64x8xf32>
    %27 = arith.addf %24, %26 : vector<64x8xf32>
    %28 = math.tanh %27 : vector<64x8xf32>
    %c0_20 = arith.constant 0 : index
    %c0_21 = arith.constant 0 : index
    %29 = vector.load %arg10[%c0_20, %c0_21] : memref<32x64xbf16, #tpu.memory_space<vmem>>, vector<32x64xbf16>
    %30 = arith.truncf %28 : vector<64x8xf32> to vector<64x8xbf16>
    %cst_22 = arith.constant dense<0.000000e+00> : vector<32x8xf32>
    %31 = tpu.matmul %29, %30, %cst_22 {dimension_numbers = #tpu.dot_dimension_numbers<[1], [0], [0], [1], [0, 0, 1, 1], [], []>} : vector<32x64xbf16>, vector<64x8xbf16>, vector<32x8xf32> -> vector<32x8xf32>
    %c0_23 = arith.constant 0 : index
    %c0_24 = arith.constant 0 : index
    %32 = vector.load %arg11[%c0_23, %c0_24] : memref<32x1xf32, #tpu.memory_space<vmem>>, vector<32x1xf32>
    %33 = vector.broadcast %32 : vector<32x1xf32> to vector<32x8xf32>
    %34 = arith.addf %31, %33 : vector<32x8xf32>
    %35 = math.tanh %34 : vector<32x8xf32>
    %c0_25 = arith.constant 0 : index
    %c0_26 = arith.constant 0 : index
    %36 = vector.load %arg12[%c0_25, %c0_26] : memref<4x32xbf16, #tpu.memory_space<vmem>>, vector<4x32xbf16>
    %37 = arith.truncf %35 : vector<32x8xf32> to vector<32x8xbf16>
    %cst_27 = arith.constant dense<0.000000e+00> : vector<4x8xf32>
    %38 = tpu.matmul %36, %37, %cst_27 {dimension_numbers = #tpu.dot_dimension_numbers<[1], [0], [0], [1], [0, 0, 1, 1], [], []>} : vector<4x32xbf16>, vector<32x8xbf16>, vector<4x8xf32> -> vector<4x8xf32>
    %c0_28 = arith.constant 0 : index
    %c0_29 = arith.constant 0 : index
    %39 = vector.load %arg13[%c0_28, %c0_29] : memref<4x1xf32, #tpu.memory_space<vmem>>, vector<4x1xf32>
    %40 = vector.broadcast %39 : vector<4x1xf32> to vector<4x8xf32>
    %41 = arith.addf %38, %40 : vector<4x8xf32>
    %c0_30 = arith.constant 0 : index
    %c0_31 = arith.constant 0 : index
    %42 = vector.load %arg14[%c0_30, %c0_31] : memref<4x8xf32, #tpu.memory_space<vmem>>, vector<4x8xf32>
    tpu.vector_store %arg14[%c0_30, %c0_31], %41 {strides = array<i32>} : memref<4x8xf32, #tpu.memory_space<vmem>>, vector<4x8xf32>,
    return
  }
  func.func @transform_0(%arg0: i32) -> (i32, i32) {
    %c0_i32 = arith.constant 0 : i32
    %c0_i32_0 = arith.constant 0 : i32
    return %arg0, %c0_i32 : i32, i32
  }
  func.func @transform_1(%arg0: i32) -> (i32, i32) {
    %c0_i32 = arith.constant 0 : i32
    %c0_i32_0 = arith.constant 0 : i32
    %c0_i32_1 = arith.constant 0 : i32
    return %c0_i32, %c0_i32_0 : i32, i32
  }
  func.func @transform_2(%arg0: i32) -> (i32, i32) {
    %c0_i32 = arith.constant 0 : i32
    %c0_i32_0 = arith.constant 0 : i32
    %c0_i32_1 = arith.constant 0 : i32
    return %c0_i32, %c0_i32_0 : i32, i32
  }
  func.func @transform_3(%arg0: i32) -> (i32, i32) {
    %c0_i32 = arith.constant 0 : i32
    %c0_i32_0 = arith.constant 0 : i32
    %c0_i32_1 = arith.constant 0 : i32
    return %c0_i32, %c0_i32_0 : i32, i32
  }
  func.func @transform_4(%arg0: i32) -> (i32, i32) {
    %c0_i32 = arith.constant 0 : i32
    %c0_i32_0 = arith.constant 0 : i32
    %c0_i32_1 = arith.constant 0 : i32
    return %c0_i32, %c0_i32_0 : i32, i32
  }
  func.func @transform_5(%arg0: i32) -> (i32, i32) {
    %c0_i32 = arith.constant 0 : i32
    %c0_i32_0 = arith.constant 0 : i32
    %c0_i32_1 = arith.constant 0 : i32
    return %c0_i32, %c0_i32_0 : i32, i32
  }
  func.func @transform_6(%arg0: i32) -> (i32, i32) {
    %c0_i32 = arith.constant 0 : i32
    %c0_i32_0 = arith.constant 0 : i32
    %c0_i32_1 = arith.constant 0 : i32
    return %c0_i32, %c0_i32_0 : i32, i32
  }
  func.func @transform_7(%arg0: i32) -> (i32, i32) {
    %c0_i32 = arith.constant 0 : i32
    %c0_i32_0 = arith.constant 0 : i32
    %c0_i32_1 = arith.constant 0 : i32
    return %c0_i32, %c0_i32_0 : i32, i32
  }
  func.func @transform_8(%arg0: i32) -> (i32, i32) {
    %c0_i32 = arith.constant 0 : i32
    %c0_i32_0 = arith.constant 0 : i32
    %c0_i32_1 = arith.constant 0 : i32
    return %c0_i32, %c0_i32_0 : i32, i32
  }
  func.func @transform_9(%arg0: i32) -> (i32, i32) {
    %c0_i32 = arith.constant 0 : i32
    %c0_i32_0 = arith.constant 0 : i32
    %c0_i32_1 = arith.constant 0 : i32
    return %c0_i32, %c0_i32_0 : i32, i32
  }
  func.func @transform_10(%arg0: i32) -> (i32, i32) {
    %c0_i32 = arith.constant 0 : i32
    %c0_i32_0 = arith.constant 0 : i32
    %c0_i32_1 = arith.constant 0 : i32
    return %c0_i32, %c0_i32_0 : i32, i32
  }
  func.func @transform_11(%arg0: i32) -> (i32, i32) {
    %c0_i32 = arith.constant 0 : i32
    %c0_i32_0 = arith.constant 0 : i32
    %c0_i32_1 = arith.constant 0 : i32
    return %c0_i32, %c0_i32_0 : i32, i32
  }
  func.func @transform_12(%arg0: i32) -> (i32, i32) {
    %c0_i32 = arith.constant 0 : i32
    %c0_i32_0 = arith.constant 0 : i32
    %c0_i32_1 = arith.constant 0 : i32
    return %c0_i32, %c0_i32_0 : i32, i32
  }
  func.func @transform_13(%arg0: i32) -> (i32, i32) {
    %c0_i32 = arith.constant 0 : i32
    %c0_i32_0 = arith.constant 0 : i32
    return %c0_i32, %arg0 : i32, i32
  }
}

</mosaic_0001>

<llo_original>
// kernel: _forward_impl.1
$region0: #{_forward_impl.1}
  #allocation0 [shape = 'u32[]', space=smem, size = 0x4, offset = 0x4, fixed_abs, tag = 'smem constant byte address 0x4 - core index']
  #allocation1 [shape = 'u32[144,128]{1,0:T(1,128)}', space=vmem, size = 0x12000, scoped, tag = 'internal scratch']
  %s0 = inlined_call_operand.vmem [shape: f32[8,16], index: 0, kind: input, shape index: {}]
  %s1 = inlined_call_operand.vmem [shape: bf16[32,16], index: 1, kind: input, shape index: {}]
  %s2 = inlined_call_operand.vmem [shape: f32[32,1], index: 2, kind: input, shape index: {}]
  %s3 = inlined_call_operand.vmem [shape: bf16[64,32], index: 3, kind: input, shape index: {}]
  %s4 = inlined_call_operand.vmem [shape: f32[64,1], index: 4, kind: input, shape index: {}]
  %s5 = inlined_call_operand.vmem [shape: bf16[128,64], index: 5, kind: input, shape index: {}]
  %s6 = inlined_call_operand.vmem [shape: f32[128,1], index: 6, kind: input, shape index: {}]
  %s7 = inlined_call_operand.vmem [shape: bf16[64,128], index: 7, kind: input, shape index: {}]
  %s8 = inlined_call_operand.vmem [shape: f32[64,1], index: 8, kind: input, shape index: {}]
  %s9 = inlined_call_operand.vmem [shape: bf16[32,64], index: 9, kind: input, shape index: {}]
  %s10 = inlined_call_operand.vmem [shape: f32[32,1], index: 10, kind: input, shape index: {}]
  %s11 = inlined_call_operand.vmem [shape: bf16[4,32], index: 11, kind: input, shape index: {}]
  %s12 = inlined_call_operand.vmem [shape: f32[4,1], index: 12, kind: input, shape index: {}]
  %s13 = inlined_call_operand.hbm [shape: f32[4,8], index: 13, kind: output, shape index: {}]
  %s14 = sld [smem:[#allocation0]]
  $region62: #{_forward_impl.1} parent=0
    _
  %s16 = ssub.s32 1, %s14
  %s17 = scalar_select 0, %s16, %s14
  $region1: #{_forward_impl.1} parent=0
    #allocation2 [shape = 'u8[2048]{0}', space=vmem, size = 0x800, scoped, tag = 'output window, operand 0, single buffered']
    #allocation3 [shape = 's32[1]{0}', space=sflag, size = 0x4, scoped, tag = 'scoped memory for _forward_impl.1']
    %18 = vsyncpa [#allocation3], 0
    // Predicated region
    $region2: #{_forward_impl.1} parent=1 // pred_check
      _
    $region3: #{_forward_impl.1} parent=1 // pred_check_branch
      %20 = sbr.rel (0) target = $region5
    $region4: #{_forward_impl.1} parent=1 // pred_region
      _
    $region5: #{_forward_impl.1} parent=1 // pred_fallthru
      _
    // Predicated region
    $region6: #{_forward_impl.1} parent=1 // pred_check
      _
    $region7: #{_forward_impl.1} parent=1 // pred_check_branch
      %22 = sbr.rel (0) target = $region9
    $region8: #{_forward_impl.1} parent=1 // pred_region
      _
    $region9: #{_forward_impl.1} parent=1 // pred_fallthru
      _
    // Predicated region
    $region10: #{_forward_impl.1} parent=1 // pred_check
      _
    $region11: #{_forward_impl.1} parent=1 // pred_check_branch
      %24 = sbr.rel (0) target = $region13
    $region12: #{_forward_impl.1} parent=1 // pred_region
      _
    $region13: #{_forward_impl.1} parent=1 // pred_fallthru
      _
    // Predicated region
    $region14: #{_forward_impl.1} parent=1 // pred_check
      _
    $region15: #{_forward_impl.1} parent=1 // pred_check_branch
      %26 = sbr.rel (0) target = $region17
    $region16: #{_forward_impl.1} parent=1 // pred_region
      _
    $region17: #{_forward_impl.1} parent=1 // pred_fallthru
      _
    // Predicated region
    $region18: #{_forward_impl.1} parent=1 // pred_check
      _
    $region19: #{_forward_impl.1} parent=1 // pred_check_branch
      %28 = sbr.rel (0) target = $region21
    $region20: #{_forward_impl.1} parent=1 // pred_region
      _
    $region21: #{_forward_impl.1} parent=1 // pred_fallthru
      _
    // Predicated region
    $region22: #{_forward_impl.1} parent=1 // pred_check
      _
    $region23: #{_forward_impl.1} parent=1 // pred_check_branch
      %30 = sbr.rel (0) target = $region25
    $region24: #{_forward_impl.1} parent=1 // pred_region
      _
    $region25: #{_forward_impl.1} parent=1 // pred_fallthru
      _
    // Predicated region
    $region26: #{_forward_impl.1} parent=1 // pred_check
      _
    $region27: #{_forward_impl.1} parent=1 // pred_check_branch
      %32 = sbr.rel (0) target = $region29
    $region28: #{_forward_impl.1} parent=1 // pred_region
      _
    $region29: #{_forward_impl.1} parent=1 // pred_fallthru
      _
    // Predicated region
    $region30: #{_forward_impl.1} parent=1 // pred_check
      _
    $region31: #{_forward_impl.1} parent=1 // pred_check_branch
      %34 = sbr.rel (0) target = $region33
    $region32: #{_forward_impl.1} parent=1 // pred_region
      _
    $region33: #{_forward_impl.1} parent=1 // pred_fallthru
      _
    // Predicated region
    $region34: #{_forward_impl.1} parent=1 // pred_check
      _
    $region35: #{_forward_impl.1} parent=1 // pred_check_branch
      %36 = sbr.rel (0) target = $region37
    $region36: #{_forward_impl.1} parent=1 // pred_region
      _
    $region37: #{_forward_impl.1} parent=1 // pred_fallthru
      _
    // Predicated region
    $region38: #{_forward_impl.1} parent=1 // pred_check
      _
    $region39: #{_forward_impl.1} parent=1 // pred_check_branch
      %38 = sbr.rel (0) target = $region41
    $region40: #{_forward_impl.1} parent=1 // pred_region
      _
    $region41: #{_forward_impl.1} parent=1 // pred_fallthru
      _
    // Predicated region
    $region42: #{_forward_impl.1} parent=1 // pred_check
      _
    $region43: #{_forward_impl.1} parent=1 // pred_check_branch
      %40 = sbr.rel (0) target = $region45
    $region44: #{_forward_impl.1} parent=1 // pred_region
      _
    $region45: #{_forward_impl.1} parent=1 // pred_fallthru
      _
    // Predicated region
    $region46: #{_forward_impl.1} parent=1 // pred_check
      _
    $region47: #{_forward_impl.1} parent=1 // pred_check_branch
      %42 = sbr.rel (0) target = $region49
    $region48: #{_forward_impl.1} parent=1 // pred_region
      _
    $region49: #{_forward_impl.1} parent=1 // pred_fallthru
      _
    // Predicated region
    $region50: #{_forward_impl.1} parent=1 // pred_check
      _
    $region51: #{_forward_impl.1} parent=1 // pred_check_branch
      %44 = sbr.rel (0) target = $region53
    $region52: #{_forward_impl.1} parent=1 // pred_region
      _
    $region53: #{_forward_impl.1} parent=1 // pred_fallthru
      _
    %v46 = vld [vmem:[%s0] sm:$0xff]
    %v47 = vpack.c.bf16 %v46, %v46
    %v48 = vld [vmem:[%s1] sm:$0xf]
    %v49 = vld [vmem:[%s1 + $0x4] sm:$0xf]
    %v50 = vld [vmem:[%s1 + $0x8] sm:$0xf]
    %v51 = vld [vmem:[%s1 + $0xc] sm:$0xf]
    %v52 = vld [vmem:[%s2] sm:$0xff]
    %v53 = vld [vmem:[%s2 + $0x8] sm:$0xff]
    %v54 = vld [vmem:[%s2 + $0x10] sm:$0xff]
    %v55 = vld [vmem:[%s2 + $0x18] sm:$0xff]
    %57 = vset.pattern.permute.xlu0 0
    %58 = vperm.xlu0 %57, %v52
    %v59 = vpop.permute.xlu0 %58
    %62 = vset.pattern.permute.xlu0 0
    %63 = vperm.xlu0 %62, %v53
    %v64 = vpop.permute.xlu0 %63
    %67 = vset.pattern.permute.xlu0 0
    %68 = vperm.xlu0 %67, %v54
    %v69 = vpop.permute.xlu0 %68
    %72 = vset.pattern.permute.xlu0 0
    %73 = vperm.xlu0 %72, %v55
    %v74 = vpop.permute.xlu0 %73
    %v80 = vunpack.c.l.b16 %v48
    %v81 = vunpack.c.l.b16 %v49
    %v82 = vunpack.c.l.b16 %v50
    %v83 = vunpack.c.l.b16 %v51
    %v84 = vpack.c.b16 %v81, %v80
    %v85 = vpack.c.b16 %v83, %v82
    %vm86 = vcmask 130048
    %v88 = vsel %vm86, %v84, 0
    %v91 = vsel %vm86, %v85, 0
    %v94 = vsel %vm86, %v47, 0
    %96 = vmatprep.subr.bf16.mxu0 0
    %97 = vmatpush1.bf16.xpose.msra.mxu0 %v94
    %98 = vmatprep.subr.bf16.mxu0 0
    %99 = vmatpush1.bf16.xpose.msra.mxu0 0
    %100 = vmatprep.subr.bf16.mxu0 0
    %101 = vmatpush1.bf16.xpose.msra.mxu0 0
    %102 = vmatprep.subr.bf16.mxu0 0
    %103 = vmatpush1.bf16.xpose.msra.mxu0 0
    %104 = vmatprep.subr.bf16.mxu0 0
    %105 = vmatpush1.bf16.xpose.msra.mxu0 0
    %106 = vmatprep.subr.bf16.mxu0 0
    %107 = vmatpush1.bf16.xpose.msra.mxu0 0
    %108 = vmatprep.subr.bf16.mxu0 0
    %109 = vmatpush1.bf16.xpose.msra.mxu0 0
    %110 = vmatprep.subr.bf16.mxu0 0
    %111 = vmatpush1.bf16.xpose.msra.mxu0 0
    %112 = vmatprep.subr.bf16.mxu0 0
    %113 = vmatpush1.bf16.xpose.msra.mxu0 0
    %114 = vmatprep.subr.bf16.mxu0 0
    %115 = vmatpush1.bf16.xpose.msra.mxu0 0
    %116 = vmatprep.subr.bf16.mxu0 0
    %117 = vmatpush1.bf16.xpose.msra.mxu0 0
    %118 = vmatprep.subr.bf16.mxu0 0
    %119 = vmatpush1.bf16.xpose.msra.mxu0 0
    %120 = vmatprep.subr.bf16.mxu0 0
    %121 = vmatpush1.bf16.xpose.msra.mxu0 0
    %122 = vmatprep.subr.bf16.mxu0 0
    %123 = vmatpush1.bf16.xpose.msra.mxu0 0
    %124 = vmatprep.subr.bf16.mxu0 0
    %125 = vmatpush1.bf16.xpose.msra.mxu0 0
    %126 = vmatprep.subr.bf16.mxu0 0
    %127 = vmatpush1.bf16.xpose.msra.mxu0 0
    %128 = vmatprep.mubr.bf16.mxu0 0
    %129 = vmatmul.mubr.bf16.gmra.mrb[0].mxu0 %v88
    %v130 = vpop.f32.mrb[0].mxu0
    %v131 = vadd.f32 %v59, %v130
    %v132 = vpop.f32.mrb[0].mxu0
    %v133 = vpop.f32.mrb[0].mxu0
    %v134 = vadd.f32 %v64, %v133
    %v135 = vpop.f32.mrb[0].mxu0
    %136 = vmatprep.mubr.bf16.mxu0 0
    %137 = vmatmul.mubr.bf16.gmra.mrb[0].mxu0 %v91
    %v138 = vpop.f32.mrb[0].mxu0
    %v139 = vadd.f32 %v69, %v138
    %v140 = vpop.f32.mrb[0].mxu0
    %v141 = vpop.f32.mrb[0].mxu0
    %v142 = vadd.f32 %v74, %v141
    %v143 = vpop.f32.mrb[0].mxu0
    %144 = vdwg.mxu0
    %v145 = vtanh.pop %v131
    %v146 = vtanh.pop %v134
    %v147 = vtanh.pop %v139
    %v148 = vtanh.pop %v142
    %v149 = vld [vmem:[%s3] sm:$0xf]
    %v150 = vld [vmem:[%s3 + $0x4] sm:$0xf]
    %v151 = vld [vmem:[%s3 + $0x8] sm:$0xf]
    %v152 = vld [vmem:[%s3 + $0xc] sm:$0xf]
    %v153 = vld [vmem:[%s3 + $0x10] sm:$0xf]
    %v154 = vld [vmem:[%s3 + $0x14] sm:$0xf]
    %v155 = vld [vmem:[%s3 + $0x18] sm:$0xf]
    %v156 = vld [vmem:[%s3 + $0x1c] sm:$0xf]
    %v157 = vpack.c.bf16 %v146, %v145
    %v158 = vpack.c.bf16 %v148, %v147
    %v159 = vld [vmem:[%s4] sm:$0xff]
    %v160 = vld [vmem:[%s4 + $0x8] sm:$0xff]
    %v161 = vld [vmem:[%s4 + $0x10] sm:$0xff]
    %v162 = vld [vmem:[%s4 + $0x18] sm:$0xff]
    %v163 = vld [vmem:[%s4 + $0x20] sm:$0xff]
    %v164 = vld [vmem:[%s4 + $0x28] sm:$0xff]
    %v165 = vld [vmem:[%s4 + $0x30] sm:$0xff]
    %v166 = vld [vmem:[%s4 + $0x38] sm:$0xff]
    %168 = vset.pattern.permute.xlu0 0
    %169 = vperm.xlu0 %168, %v159
    %v170 = vpop.permute.xlu0 %169
    %173 = vset.pattern.permute.xlu0 0
    %174 = vperm.xlu0 %173, %v160
    %v175 = vpop.permute.xlu0 %174
    %178 = vset.pattern.permute.xlu0 0
    %179 = vperm.xlu0 %178, %v161
    %v180 = vpop.permute.xlu0 %179
    %183 = vset.pattern.permute.xlu0 0
    %184 = vperm.xlu0 %183, %v162
    %v185 = vpop.permute.xlu0 %184
    %188 = vset.pattern.permute.xlu0 0
    %189 = vperm.xlu0 %188, %v163
    %v190 = vpop.permute.xlu0 %189
    %193 = vset.pattern.permute.xlu0 0
    %194 = vperm.xlu0 %193, %v164
    %v195 = vpop.permute.xlu0 %194
    %198 = vset.pattern.permute.xlu0 0
    %199 = vperm.xlu0 %198, %v165
    %v200 = vpop.permute.xlu0 %199
    %203 = vset.pattern.permute.xlu0 0
    %204 = vperm.xlu0 %203, %v166
    %v205 = vpop.permute.xlu0 %204
    %v215 = vunpack.c.l.b16 %v149
    %v216 = vunpack.c.l.b16 %v150
    %v217 = vunpack.c.l.b16 %v151
    %v218 = vunpack.c.l.b16 %v152
    %v219 = vunpack.c.l.b16 %v153
    %v220 = vunpack.c.l.b16 %v154
    %v221 = vunpack.c.l.b16 %v155
    %v222 = vunpack.c.l.b16 %v156
    %v223 = vpack.c.b16 %v216, %v215
    %v224 = vpack.c.b16 %v218, %v217
    %v225 = vpack.c.b16 %v220, %v219
    %v226 = vpack.c.b16 %v222, %v221
    %vm227 = vcmask 261120
    %v229 = vsel %vm227, %v223, 0
    %v232 = vsel %vm227, %v224, 0
    %v235 = vsel %vm227, %v225, 0
    %v238 = vsel %vm227, %v226, 0
    %240 = vmatprep.subr.bf16.mxu0 0
    %241 = vmatpush1.bf16.msra.mxu0 %v157
    %242 = vmatprep.subr.bf16.mxu0 0
    %243 = vmatpush1.bf16.msra.mxu0 %v158
    %244 = vmatprep.subr.bf16.mxu0 0
    %245 = vmatpush1.bf16.msra.mxu0 0
    %246 = vmatprep.subr.bf16.mxu0 0
    %247 = vmatpush1.bf16.msra.mxu0 0
    %248 = vmatprep.subr.bf16.mxu0 0
    %249 = vmatpush1.bf16.msra.mxu0 0
    %250 = vmatprep.subr.bf16.mxu0 0
    %251 = vmatpush1.bf16.msra.mxu0 0
    %252 = vmatprep.subr.bf16.mxu0 0
    %253 = vmatpush1.bf16.msra.mxu0 0
    %254 = vmatprep.subr.bf16.mxu0 0
    %255 = vmatpush1.bf16.msra.mxu0 0
    %256 = vmatprep.subr.bf16.mxu0 0
    %257 = vmatpush1.bf16.msra.mxu0 0
    %258 = vmatprep.subr.bf16.mxu0 0
    %259 = vmatpush1.bf16.msra.mxu0 0
    %260 = vmatprep.subr.bf16.mxu0 0
    %261 = vmatpush1.bf16.msra.mxu0 0
    %262 = vmatprep.subr.bf16.mxu0 0
    %263 = vmatpush1.bf16.msra.mxu0 0
    %264 = vmatprep.subr.bf16.mxu0 0
    %265 = vmatpush1.bf16.msra.mxu0 0
    %266 = vmatprep.subr.bf16.mxu0 0
    %267 = vmatpush1.bf16.msra.mxu0 0
    %268 = vmatprep.subr.bf16.mxu0 0
    %269 = vmatpush1.bf16.msra.mxu0 0
    %270 = vmatprep.subr.bf16.mxu0 0
    %271 = vmatpush1.bf16.msra.mxu0 0
    %272 = vmatprep.mubr.bf16.mxu0 0
    %273 = vmatmul.mubr.bf16.gmra.mrb[0].mxu0 %v229
    %v274 = vpop.f32.mrb[0].mxu0
    %v275 = vadd.f32 %v170, %v274
    %v276 = vpop.f32.mrb[0].mxu0
    %v277 = vpop.f32.mrb[0].mxu0
    %v278 = vadd.f32 %v175, %v277
    %v279 = vpop.f32.mrb[0].mxu0
    %280 = vmatprep.mubr.bf16.mxu0 0
    %281 = vmatmul.mubr.bf16.gmra.mrb[0].mxu0 %v232
    %v282 = vpop.f32.mrb[0].mxu0
    %v283 = vadd.f32 %v180, %v282
    %v284 = vpop.f32.mrb[0].mxu0
    %v285 = vpop.f32.mrb[0].mxu0
    %v286 = vadd.f32 %v185, %v285
    %v287 = vpop.f32.mrb[0].mxu0
    %288 = vmatprep.mubr.bf16.mxu0 0
    %289 = vmatmul.mubr.bf16.gmra.mrb[0].mxu0 %v235
    %v290 = vpop.f32.mrb[0].mxu0
    %v291 = vadd.f32 %v190, %v290
    %v292 = vpop.f32.mrb[0].mxu0
    %v293 = vpop.f32.mrb[0].mxu0
    %v294 = vadd.f32 %v195, %v293
    %v295 = vpop.f32.mrb[0].mxu0
    %296 = vmatprep.mubr.bf16.mxu0 0
    %297 = vmatmul.mubr.bf16.gmra.mrb[0].mxu0 %v238
    %v298 = vpop.f32.mrb[0].mxu0
    %v299 = vadd.f32 %v200, %v298
    %v300 = vpop.f32.mrb[0].mxu0
    %v301 = vpop.f32.mrb[0].mxu0
    %v302 = vadd.f32 %v205, %v301
    %v303 = vpop.f32.mrb[0].mxu0
    %304 = vdwg.mxu0
    %v305 = vtanh.pop %v275
    %v306 = vtanh.pop %v278
    %v307 = vtanh.pop %v283
    %v308 = vtanh.pop %v286
    %v309 = vtanh.pop %v291
    %v310 = vtanh.pop %v294
    %v311 = vtanh.pop %v299
    %v312 = vtanh.pop %v302
    %v313 = vld [vmem:[%s5] sm:$0xf]
    %v314 = vld [vmem:[%s5 + $0x4] sm:$0xf]
    %v315 = vld [vmem:[%s5 + $0x8] sm:$0xf]
    %v316 = vld [vmem:[%s5 + $0xc] sm:$0xf]
    %v317 = vld [vmem:[%s5 + $0x10] sm:$0xf]
    %v318 = vld [vmem:[%s5 + $0x14] sm:$0xf]
    %v319 = vld [vmem:[%s5 + $0x18] sm:$0xf]
    %v320 = vld [vmem:[%s5 + $0x1c] sm:$0xf]
    %v321 = vld [vmem:[%s5 + $0x20] sm:$0xf]
    %v322 = vld [vmem:[%s5 + $0x24] sm:$0xf]
    %v323 = vld [vmem:[%s5 + $0x28] sm:$0xf]
    %v324 = vld [vmem:[%s5 + $0x2c] sm:$0xf]
    %v325 = vld [vmem:[%s5 + $0x30] sm:$0xf]
    %v326 = vld [vmem:[%s5 + $0x34] sm:$0xf]
    %v327 = vld [vmem:[%s5 + $0x38] sm:$0xf]
    %v328 = vld [vmem:[%s5 + $0x3c] sm:$0xf]
    %v329 = vpack.c.bf16 %v306, %v305
    %v330 = vpack.c.bf16 %v308, %v307
    %v331 = vpack.c.bf16 %v310, %v309
    %v332 = vpack.c.bf16 %v312, %v311
    %v333 = vld [vmem:[%s6] sm:$0xff]
    %v334 = vld [vmem:[%s6 + $0x8] sm:$0xff]
    %v335 = vld [vmem:[%s6 + $0x10] sm:$0xff]
    %v336 = vld [vmem:[%s6 + $0x18] sm:$0xff]
    %v337 = vld [vmem:[%s6 + $0x20] sm:$0xff]
    %v338 = vld [vmem:[%s6 + $0x28] sm:$0xff]
    %v339 = vld [vmem:[%s6 + $0x30] sm:$0xff]
    %v340 = vld [vmem:[%s6 + $0x38] sm:$0xff]
    %v341 = vld [vmem:[%s6 + $0x40] sm:$0xff]
    %v342 = vld [vmem:[%s6 + $0x48] sm:$0xff]
    %v343 = vld [vmem:[%s6 + $0x50] sm:$0xff]
    %v344 = vld [vmem:[%s6 + $0x58] sm:$0xff]
    %v345 = vld [vmem:[%s6 + $0x60] sm:$0xff]
    %v346 = vld [vmem:[%s6 + $0x68] sm:$0xff]
    %v347 = vld [vmem:[%s6 + $0x70] sm:$0xff]
    %v348 = vld [vmem:[%s6 + $0x78] sm:$0xff]
    %350 = vset.pattern.permute.xlu0 0
    %351 = vperm.xlu0 %350, %v333
    %v352 = vpop.permute.xlu0 %351
    %355 = vset.pattern.permute.xlu0 0
    %356 = vperm.xlu0 %355, %v334
    %v357 = vpop.permute.xlu0 %356
    %360 = vset.pattern.permute.xlu0 0
    %361 = vperm.xlu0 %360, %v335
    %v362 = vpop.permute.xlu0 %361
    %365 = vset.pattern.permute.xlu0 0
    %366 = vperm.xlu0 %365, %v336
    %v367 = vpop.permute.xlu0 %366
    %370 = vset.pattern.permute.xlu0 0
    %371 = vperm.xlu0 %370, %v337
    %v372 = vpop.permute.xlu0 %371
    %375 = vset.pattern.permute.xlu0 0
    %376 = vperm.xlu0 %375, %v338
    %v377 = vpop.permute.xlu0 %376
    %380 = vset.pattern.permute.xlu0 0
    %381 = vperm.xlu0 %380, %v339
    %v382 = vpop.permute.xlu0 %381
    %385 = vset.pattern.permute.xlu0 0
    %386 = vperm.xlu0 %385, %v340
    %v387 = vpop.permute.xlu0 %386
    %390 = vset.pattern.permute.xlu0 0
    %391 = vperm.xlu0 %390, %v341
    %v392 = vpop.permute.xlu0 %391
    %395 = vset.pattern.permute.xlu0 0
    %396 = vperm.xlu0 %395, %v342
    %v397 = vpop.permute.xlu0 %396
    %400 = vset.pattern.permute.xlu0 0
    %401 = vperm.xlu0 %400, %v343
    %v402 = vpop.permute.xlu0 %401
    %405 = vset.pattern.permute.xlu0 0
    %406 = vperm.xlu0 %405, %v344
    %v407 = vpop.permute.xlu0 %406
    %410 = vset.pattern.permute.xlu0 0
    %411 = vperm.xlu0 %410, %v345
    %v412 = vpop.permute.xlu0 %411
    %415 = vset.pattern.permute.xlu0 0
    %416 = vperm.xlu0 %415, %v346
    %v417 = vpop.permute.xlu0 %416
    %420 = vset.pattern.permute.xlu0 0
    %421 = vperm.xlu0 %420, %v347
    %v422 = vpop.permute.xlu0 %421
    %425 = vset.pattern.permute.xlu0 0
    %426 = vperm.xlu0 %425, %v348
    %v427 = vpop.permute.xlu0 %426
    %v445 = vunpack.c.l.b16 %v313
    %v446 = vunpack.c.l.b16 %v314
    %v447 = vunpack.c.l.b16 %v315
    %v448 = vunpack.c.l.b16 %v316
    %v449 = vunpack.c.l.b16 %v317
    %v450 = vunpack.c.l.b16 %v318
    %v451 = vunpack.c.l.b16 %v319
    %v452 = vunpack.c.l.b16 %v320
    %v453 = vunpack.c.l.b16 %v321
    %v454 = vunpack.c.l.b16 %v322
    %v455 = vunpack.c.l.b16 %v323
    %v456 = vunpack.c.l.b16 %v324
    %v457 = vunpack.c.l.b16 %v325
    %v458 = vunpack.c.l.b16 %v326
    %v459 = vunpack.c.l.b16 %v327
    %v460 = vunpack.c.l.b16 %v328
    %v461 = vpack.c.b16 %v446, %v445
    %v462 = vpack.c.b16 %v448, %v447
    %v463 = vpack.c.b16 %v450, %v449
    %v464 = vpack.c.b16 %v452, %v451
    %v465 = vpack.c.b16 %v454, %v453
    %v466 = vpack.c.b16 %v456, %v455
    %v467 = vpack.c.b16 %v458, %v457
    %v468 = vpack.c.b16 %v460, %v459
    %vm469 = vcmask 523264
    %v471 = vsel %vm469, %v461, 0
    %v474 = vsel %vm469, %v462, 0
    %v477 = vsel %vm469, %v463, 0
    %v480 = vsel %vm469, %v464, 0
    %v483 = vsel %vm469, %v465, 0
    %v486 = vsel %vm469, %v466, 0
    %v489 = vsel %vm469, %v467, 0
    %v492 = vsel %vm469, %v468, 0
    %494 = vmatprep.subr.bf16.mxu0 0
    %495 = vmatpush1.bf16.msra.mxu0 %v329
    %496 = vmatprep.subr.bf16.mxu0 0
    %497 = vmatpush1.bf16.msra.mxu0 %v330
    %498 = vmatprep.subr.bf16.mxu0 0
    %499 = vmatpush1.bf16.msra.mxu0 %v331
    %500 = vmatprep.subr.bf16.mxu0 0
    %501 = vmatpush1.bf16.msra.mxu0 %v332
    %502 = vmatprep.subr.bf16.mxu0 0
    %503 = vmatpush1.bf16.msra.mxu0 0
    %504 = vmatprep.subr.bf16.mxu0 0
    %505 = vmatpush1.bf16.msra.mxu0 0
    %506 = vmatprep.subr.bf16.mxu0 0
    %507 = vmatpush1.bf16.msra.mxu0 0
    %508 = vmatprep.subr.bf16.mxu0 0
    %509 = vmatpush1.bf16.msra.mxu0 0
    %510 = vmatprep.subr.bf16.mxu0 0
    %511 = vmatpush1.bf16.msra.mxu0 0
    %512 = vmatprep.subr.bf16.mxu0 0
    %513 = vmatpush1.bf16.msra.mxu0 0
    %514 = vmatprep.subr.bf16.mxu0 0
    %515 = vmatpush1.bf16.msra.mxu0 0
    %516 = vmatprep.subr.bf16.mxu0 0
    %517 = vmatpush1.bf16.msra.mxu0 0
    %518 = vmatprep.subr.bf16.mxu0 0
    %519 = vmatpush1.bf16.msra.mxu0 0
    %520 = vmatprep.subr.bf16.mxu0 0
    %521 = vmatpush1.bf16.msra.mxu0 0
    %522 = vmatprep.subr.bf16.mxu0 0
    %523 = vmatpush1.bf16.msra.mxu0 0
    %524 = vmatprep.subr.bf16.mxu0 0
    %525 = vmatpush1.bf16.msra.mxu0 0
    %526 = vmatprep.mubr.bf16.mxu0 0
    %527 = vmatmul.mubr.bf16.gmra.mrb[0].mxu0 %v471
    %v528 = vpop.f32.mrb[0].mxu0
    %v529 = vadd.f32 %v352, %v528
    %v530 = vpop.f32.mrb[0].mxu0
    %v531 = vpop.f32.mrb[0].mxu0
    %v532 = vadd.f32 %v357, %v531
    %v533 = vpop.f32.mrb[0].mxu0
    %534 = vmatprep.mubr.bf16.mxu0 0
    %535 = vmatmul.mubr.bf16.gmra.mrb[0].mxu0 %v474
    %v536 = vpop.f32.mrb[0].mxu0
    %v537 = vadd.f32 %v362, %v536
    %v538 = vpop.f32.mrb[0].mxu0
    %v539 = vpop.f32.mrb[0].mxu0
    %v540 = vadd.f32 %v367, %v539
    %v541 = vpop.f32.mrb[0].mxu0
    %542 = vmatprep.mubr.bf16.mxu0 0
    %543 = vmatmul.mubr.bf16.gmra.mrb[0].mxu0 %v477
    %v544 = vpop.f32.mrb[0].mxu0
    %v545 = vadd.f32 %v372, %v544
    %v546 = vpop.f32.mrb[0].mxu0
    %v547 = vpop.f32.mrb[0].mxu0
    %v548 = vadd.f32 %v377, %v547
    %v549 = vpop.f32.mrb[0].mxu0
    %550 = vmatprep.mubr.bf16.mxu0 0
    %551 = vmatmul.mubr.bf16.gmra.mrb[0].mxu0 %v480
    %v552 = vpop.f32.mrb[0].mxu0
    %v553 = vadd.f32 %v382, %v552
    %v554 = vpop.f32.mrb[0].mxu0
    %v555 = vpop.f32.mrb[0].mxu0
    %v556 = vadd.f32 %v387, %v555
    %v557 = vpop.f32.mrb[0].mxu0
    %558 = vmatprep.mubr.bf16.mxu0 0
    %559 = vmatmul.mubr.bf16.gmra.mrb[0].mxu0 %v483
    %v560 = vpop.f32.mrb[0].mxu0
    %v561 = vadd.f32 %v392, %v560
    %v562 = vpop.f32.mrb[0].mxu0
    %v563 = vpop.f32.mrb[0].mxu0
    %v564 = vadd.f32 %v397, %v563
    %v565 = vpop.f32.mrb[0].mxu0
    %566 = vmatprep.mubr.bf16.mxu0 0
    %567 = vmatmul.mubr.bf16.gmra.mrb[0].mxu0 %v486
    %v568 = vpop.f32.mrb[0].mxu0
    %v569 = vadd.f32 %v402, %v568
    %v570 = vpop.f32.mrb[0].mxu0
    %v571 = vpop.f32.mrb[0].mxu0
    %v572 = vadd.f32 %v407, %v571
    %v573 = vpop.f32.mrb[0].mxu0
    %574 = vmatprep.mubr.bf16.mxu0 0
    %575 = vmatmul.mubr.bf16.gmra.mrb[0].mxu0 %v489
    %v576 = vpop.f32.mrb[0].mxu0
    %v577 = vadd.f32 %v412, %v576
    %v578 = vpop.f32.mrb[0].mxu0
    %v579 = vpop.f32.mrb[0].mxu0
    %v580 = vadd.f32 %v417, %v579
    %v581 = vpop.f32.mrb[0].mxu0
    %582 = vmatprep.mubr.bf16.mxu0 0
    %583 = vmatmul.mubr.bf16.gmra.mrb[0].mxu0 %v492
    %v584 = vpop.f32.mrb[0].mxu0
    %v585 = vadd.f32 %v422, %v584
    %v586 = vpop.f32.mrb[0].mxu0
    %v587 = vpop.f32.mrb[0].mxu0
    %v588 = vadd.f32 %v427, %v587
    %v589 = vpop.f32.mrb[0].mxu0
    %590 = vdwg.mxu0
    %v591 = vtanh.pop %v529
    %v592 = vtanh.pop %v532
    %v593 = vtanh.pop %v537
    %v594 = vtanh.pop %v540
    %v595 = vtanh.pop %v545
    %v596 = vtanh.pop %v548
    %v597 = vtanh.pop %v553
    %v598 = vtanh.pop %v556
    %v599 = vtanh.pop %v561
    %v600 = vtanh.pop %v564
    %v601 = vtanh.pop %v569
    %v602 = vtanh.pop %v572
    %v603 = vtanh.pop %v577
    %v604 = vtanh.pop %v580
    %v605 = vtanh.pop %v585
    %v606 = vtanh.pop %v588
    %v607 = vld [vmem:[%s7] sm:$0xf]
    %v608 = vld [vmem:[%s7 + $0x4] sm:$0xf]
    %v609 = vld [vmem:[%s7 + $0x8] sm:$0xf]
    %v610 = vld [vmem:[%s7 + $0xc] sm:$0xf]
    %v611 = vld [vmem:[%s7 + $0x10] sm:$0xf]
    %v612 = vld [vmem:[%s7 + $0x14] sm:$0xf]
    %v613 = vld [vmem:[%s7 + $0x18] sm:$0xf]
    %v614 = vld [vmem:[%s7 + $0x1c] sm:$0xf]
    %v615 = vpack.c.bf16 %v592, %v591
    %v616 = vpack.c.bf16 %v594, %v593
    %v617 = vpack.c.bf16 %v596, %v595
    %v618 = vpack.c.bf16 %v598, %v597
    %v619 = vpack.c.bf16 %v600, %v599
    %v620 = vpack.c.bf16 %v602, %v601
    %v621 = vpack.c.bf16 %v604, %v603
    %v622 = vpack.c.bf16 %v606, %v605
    %v623 = vld [vmem:[%s8] sm:$0xff]
    %v624 = vld [vmem:[%s8 + $0x8] sm:$0xff]
    %v625 = vld [vmem:[%s8 + $0x10] sm:$0xff]
    %v626 = vld [vmem:[%s8 + $0x18] sm:$0xff]
    %v627 = vld [vmem:[%s8 + $0x20] sm:$0xff]
    %v628 = vld [vmem:[%s8 + $0x28] sm:$0xff]
    %v629 = vld [vmem:[%s8 + $0x30] sm:$0xff]
    %v630 = vld [vmem:[%s8 + $0x38] sm:$0xff]
    %632 = vset.pattern.permute.xlu0 0
    %633 = vperm.xlu0 %632, %v623
    %v634 = vpop.permute.xlu0 %633
    %637 = vset.pattern.permute.xlu0 0
    %638 = vperm.xlu0 %637, %v624
    %v639 = vpop.permute.xlu0 %638
    %642 = vset.pattern.permute.xlu0 0
    %643 = vperm.xlu0 %642, %v625
    %v644 = vpop.permute.xlu0 %643
    %647 = vset.pattern.permute.xlu0 0
    %648 = vperm.xlu0 %647, %v626
    %v649 = vpop.permute.xlu0 %648
    %652 = vset.pattern.permute.xlu0 0
    %653 = vperm.xlu0 %652, %v627
    %v654 = vpop.permute.xlu0 %653
    %657 = vset.pattern.permute.xlu0 0
    %658 = vperm.xlu0 %657, %v628
    %v659 = vpop.permute.xlu0 %658
    %662 = vset.pattern.permute.xlu0 0
    %663 = vperm.xlu0 %662, %v629
    %v664 = vpop.permute.xlu0 %663
    %667 = vset.pattern.permute.xlu0 0
    %668 = vperm.xlu0 %667, %v630
    %v669 = vpop.permute.xlu0 %668
    %v679 = vunpack.c.l.b16 %v607
    %v680 = vunpack.c.l.b16 %v608
    %v681 = vunpack.c.l.b16 %v609
    %v682 = vunpack.c.l.b16 %v610
    %v683 = vunpack.c.l.b16 %v611
    %v684 = vunpack.c.l.b16 %v612
    %v685 = vunpack.c.l.b16 %v613
    %v686 = vunpack.c.l.b16 %v614
    %v687 = vpack.c.b16 %v680, %v679
    %v688 = vpack.c.b16 %v682, %v681
    %v689 = vpack.c.b16 %v684, %v683
    %v690 = vpack.c.b16 %v686, %v685
    %695 = vmatprep.subr.bf16.mxu0 0
    %696 = vmatpush1.bf16.msra.mxu0 %v615
    %697 = vmatprep.subr.bf16.mxu0 0
    %698 = vmatpush1.bf16.msra.mxu0 %v616
    %699 = vmatprep.subr.bf16.mxu0 0
    %700 = vmatpush1.bf16.msra.mxu0 %v617
    %701 = vmatprep.subr.bf16.mxu0 0
    %702 = vmatpush1.bf16.msra.mxu0 %v618
    %703 = vmatprep.subr.bf16.mxu0 0
    %704 = vmatpush1.bf16.msra.mxu0 %v619
    %705 = vmatprep.subr.bf16.mxu0 0
    %706 = vmatpush1.bf16.msra.mxu0 %v620
    %707 = vmatprep.subr.bf16.mxu0 0
    %708 = vmatpush1.bf16.msra.mxu0 %v621
    %709 = vmatprep.subr.bf16.mxu0 0
    %710 = vmatpush1.bf16.msra.mxu0 %v622
    %711 = vmatprep.subr.bf16.mxu0 0
    %712 = vmatpush1.bf16.msra.mxu0 0
    %713 = vmatprep.subr.bf16.mxu0 0
    %714 = vmatpush1.bf16.msra.mxu0 0
    %715 = vmatprep.subr.bf16.mxu0 0
    %716 = vmatpush1.bf16.msra.mxu0 0
    %717 = vmatprep.subr.bf16.mxu0 0
    %718 = vmatpush1.bf16.msra.mxu0 0
    %719 = vmatprep.subr.bf16.mxu0 0
    %720 = vmatpush1.bf16.msra.mxu0 0
    %721 = vmatprep.subr.bf16.mxu0 0
    %722 = vmatpush1.bf16.msra.mxu0 0
    %723 = vmatprep.subr.bf16.mxu0 0
    %724 = vmatpush1.bf16.msra.mxu0 0
    %725 = vmatprep.subr.bf16.mxu0 0
    %726 = vmatpush1.bf16.msra.mxu0 0
    %727 = vmatprep.mubr.bf16.mxu0 0
    %728 = vmatmul.mubr.bf16.gmra.mrb[0].mxu0 %v687
    %v729 = vpop.f32.mrb[0].mxu0
    %v730 = vadd.f32 %v634, %v729
    %v731 = vpop.f32.mrb[0].mxu0
    %v732 = vpop.f32.mrb[0].mxu0
    %v733 = vadd.f32 %v639, %v732
    %v734 = vpop.f32.mrb[0].mxu0
    %735 = vmatprep.mubr.bf16.mxu0 0
    %736 = vmatmul.mubr.bf16.gmra.mrb[0].mxu0 %v688
    %v737 = vpop.f32.mrb[0].mxu0
    %v738 = vadd.f32 %v644, %v737
    %v739 = vpop.f32.mrb[0].mxu0
    %v740 = vpop.f32.mrb[0].mxu0
    %v741 = vadd.f32 %v649, %v740
    %v742 = vpop.f32.mrb[0].mxu0
    %743 = vmatprep.mubr.bf16.mxu0 0
    %744 = vmatmul.mubr.bf16.gmra.mrb[0].mxu0 %v689
    %v745 = vpop.f32.mrb[0].mxu0
    %v746 = vadd.f32 %v654, %v745
    %v747 = vpop.f32.mrb[0].mxu0
    %v748 = vpop.f32.mrb[0].mxu0
    %v749 = vadd.f32 %v659, %v748
    %v750 = vpop.f32.mrb[0].mxu0
    %751 = vmatprep.mubr.bf16.mxu0 0
    %752 = vmatmul.mubr.bf16.gmra.mrb[0].mxu0 %v690
    %v753 = vpop.f32.mrb[0].mxu0
    %v754 = vadd.f32 %v664, %v753
    %v755 = vpop.f32.mrb[0].mxu0
    %v756 = vpop.f32.mrb[0].mxu0
    %v757 = vadd.f32 %v669, %v756
    %v758 = vpop.f32.mrb[0].mxu0
    %759 = vdwg.mxu0
    %v760 = vtanh.pop %v730
    %v761 = vtanh.pop %v733
    %v762 = vtanh.pop %v738
    %v763 = vtanh.pop %v741
    %v764 = vtanh.pop %v746
    %v765 = vtanh.pop %v749
    %v766 = vtanh.pop %v754
    %v767 = vtanh.pop %v757
    %v768 = vld [vmem:[%s9] sm:$0xf]
    %v769 = vld [vmem:[%s9 + $0x4] sm:$0xf]
    %v770 = vld [vmem:[%s9 + $0x8] sm:$0xf]
    %v771 = vld [vmem:[%s9 + $0xc] sm:$0xf]
    %v772 = vpack.c.bf16 %v761, %v760
    %v773 = vpack.c.bf16 %v763, %v762
    %v774 = vpack.c.bf16 %v765, %v764
    %v775 = vpack.c.bf16 %v767, %v766
    %v776 = vld [vmem:[%s10] sm:$0xff]
    %v777 = vld [vmem:[%s10 + $0x8] sm:$0xff]
    %v778 = vld [vmem:[%s10 + $0x10] sm:$0xff]
    %v779 = vld [vmem:[%s10 + $0x18] sm:$0xff]
    %781 = vset.pattern.permute.xlu0 0
    %782 = vperm.xlu0 %781, %v776
    %v783 = vpop.permute.xlu0 %782
    %786 = vset.pattern.permute.xlu0 0
    %787 = vperm.xlu0 %786, %v777
    %v788 = vpop.permute.xlu0 %787
    %791 = vset.pattern.permute.xlu0 0
    %792 = vperm.xlu0 %791, %v778
    %v793 = vpop.permute.xlu0 %792
    %796 = vset.pattern.permute.xlu0 0
    %797 = vperm.xlu0 %796, %v779
    %v798 = vpop.permute.xlu0 %797
    %v804 = vunpack.c.l.b16 %v768
    %v805 = vunpack.c.l.b16 %v769
    %v806 = vunpack.c.l.b16 %v770
    %v807 = vunpack.c.l.b16 %v771
    %v808 = vpack.c.b16 %v805, %v804
    %v809 = vpack.c.b16 %v807, %v806
    %v811 = vsel %vm469, %v808, 0
    %v814 = vsel %vm469, %v809, 0
    %816 = vmatprep.subr.bf16.mxu0 0
    %817 = vmatpush1.bf16.msra.mxu0 %v772
    %818 = vmatprep.subr.bf16.mxu0 0
    %819 = vmatpush1.bf16.msra.mxu0 %v773
    %820 = vmatprep.subr.bf16.mxu0 0
    %821 = vmatpush1.bf16.msra.mxu0 %v774
    %822 = vmatprep.subr.bf16.mxu0 0
    %823 = vmatpush1.bf16.msra.mxu0 %v775
    %824 = vmatprep.subr.bf16.mxu0 0
    %825 = vmatpush1.bf16.msra.mxu0 0
    %826 = vmatprep.subr.bf16.mxu0 0
    %827 = vmatpush1.bf16.msra.mxu0 0
    %828 = vmatprep.subr.bf16.mxu0 0
    %829 = vmatpush1.bf16.msra.mxu0 0
    %830 = vmatprep.subr.bf16.mxu0 0
    %831 = vmatpush1.bf16.msra.mxu0 0
    %832 = vmatprep.subr.bf16.mxu0 0
    %833 = vmatpush1.bf16.msra.mxu0 0
    %834 = vmatprep.subr.bf16.mxu0 0
    %835 = vmatpush1.bf16.msra.mxu0 0
    %836 = vmatprep.subr.bf16.mxu0 0
    %837 = vmatpush1.bf16.msra.mxu0 0
    %838 = vmatprep.subr.bf16.mxu0 0
    %839 = vmatpush1.bf16.msra.mxu0 0
    %840 = vmatprep.subr.bf16.mxu0 0
    %841 = vmatpush1.bf16.msra.mxu0 0
    %842 = vmatprep.subr.bf16.mxu0 0
    %843 = vmatpush1.bf16.msra.mxu0 0
    %844 = vmatprep.subr.bf16.mxu0 0
    %845 = vmatpush1.bf16.msra.mxu0 0
    %846 = vmatprep.subr.bf16.mxu0 0
    %847 = vmatpush1.bf16.msra.mxu0 0
    %848 = vmatprep.mubr.bf16.mxu0 0
    %849 = vmatmul.mubr.bf16.gmra.mrb[0].mxu0 %v811
    %v850 = vpop.f32.mrb[0].mxu0
    %v851 = vadd.f32 %v783, %v850
    %v852 = vpop.f32.mrb[0].mxu0
    %v853 = vpop.f32.mrb[0].mxu0
    %v854 = vadd.f32 %v788, %v853
    %v855 = vpop.f32.mrb[0].mxu0
    %856 = vmatprep.mubr.bf16.mxu0 0
    %857 = vmatmul.mubr.bf16.gmra.mrb[0].mxu0 %v814
    %v858 = vpop.f32.mrb[0].mxu0
    %v859 = vadd.f32 %v793, %v858
    %v860 = vpop.f32.mrb[0].mxu0
    %v861 = vpop.f32.mrb[0].mxu0
    %v862 = vadd.f32 %v798, %v861
    %v863 = vpop.f32.mrb[0].mxu0
    %864 = vdwg.mxu0
    %v865 = vtanh.pop %v851
    %v866 = vtanh.pop %v854
    %v867 = vtanh.pop %v859
    %v868 = vtanh.pop %v862
    %v869 = vld [vmem:[%s11] sm:$0x3]
    %v870 = vpack.c.bf16 %v866, %v865
    %v871 = vpack.c.bf16 %v868, %v867
    %v872 = vld [vmem:[%s12] sm:$0xf]
    %874 = vset.pattern.permute.xlu0 0
    %875 = vperm.xlu0 %874, %v872
    %v876 = vpop.permute.xlu0 %875
    %v879 = vsel %vm227, %v869, 0
    %881 = vmatprep.subr.bf16.mxu0 0
    %882 = vmatpush1.bf16.msra.mxu0 %v870
    %883 = vmatprep.subr.bf16.mxu0 0
    %884 = vmatpush1.bf16.msra.mxu0 %v871
    %885 = vmatprep.subr.bf16.mxu0 0
    %886 = vmatpush1.bf16.msra.mxu0 0
    %887 = vmatprep.subr.bf16.mxu0 0
    %888 = vmatpush1.bf16.msra.mxu0 0
    %889 = vmatprep.subr.bf16.mxu0 0
    %890 = vmatpush1.bf16.msra.mxu0 0
    %891 = vmatprep.subr.bf16.mxu0 0
    %892 = vmatpush1.bf16.msra.mxu0 0
    %893 = vmatprep.subr.bf16.mxu0 0
    %894 = vmatpush1.bf16.msra.mxu0 0
    %895 = vmatprep.subr.bf16.mxu0 0
    %896 = vmatpush1.bf16.msra.mxu0 0
    %897 = vmatprep.subr.bf16.mxu0 0
    %898 = vmatpush1.bf16.msra.mxu0 0
    %899 = vmatprep.subr.bf16.mxu0 0
    %900 = vmatpush1.bf16.msra.mxu0 0
    %901 = vmatprep.subr.bf16.mxu0 0
    %902 = vmatpush1.bf16.msra.mxu0 0
    %903 = vmatprep.subr.bf16.mxu0 0
    %904 = vmatpush1.bf16.msra.mxu0 0
    %905 = vmatprep.subr.bf16.mxu0 0
    %906 = vmatpush1.bf16.msra.mxu0 0
    %907 = vmatprep.subr.bf16.mxu0 0
    %908 = vmatpush1.bf16.msra.mxu0 0
    %909 = vmatprep.subr.bf16.mxu0 0
    %910 = vmatpush1.bf16.msra.mxu0 0
    %911 = vmatprep.subr.bf16.mxu0 0
    %912 = vmatpush1.bf16.msra.mxu0 0
    %913 = vmatprep.mubr.bf16.mxu0 0
    %914 = vmatmul.mubr.bf16.gmra.mrb[0].mxu0 %v879
    %v915 = vpop.f32.mrb[0].mxu0
    %v916 = vadd.f32 %v876, %v915
    %v917 = vpop.f32.mrb[0].mxu0
    %v918 = vpop.f32.mrb[0].mxu0
    %v919 = vpop.f32.mrb[0].mxu0
    %920 = vdwg.mxu0
    %vm921 = vcmask 60416
    %922 = vst.msk [vmem:[#allocation2] sm:$0xf] %vm921, %v916
    // Predicated region
    $region54: #{_forward_impl.1} parent=1 // pred_check
      _
    $region55: #{_forward_impl.1} parent=1 // pred_check_branch
      %924 = sbr.rel (0) target = $region57
    $region56: #{_forward_impl.1} parent=1 // pred_region
      %s926 = ssub.s32 64, 64
      %927 = vsyncadd [#allocation3], %s926
      %s929 = sshll.u32 [#allocation2], 4
      %s930 = int_to_ptr.vmem [resolvable:$true] %s929
      %932 = dma.vmem_to_hbm [thread:$0]  %s930, 64, %s13, [#allocation3]
    $region57: #{_forward_impl.1} parent=1 // pred_fallthru
      _
    // Predicated region
    $region58: #{_forward_impl.1} parent=1 // pred_check
      _
    $region59: #{_forward_impl.1} parent=1 // pred_check_branch
      %934 = sbr.rel (0) target = $region61
    $region60: #{_forward_impl.1} parent=1 // pred_region
      %935 = dma.done [#allocation3], 64
    $region61: #{_forward_impl.1} parent=1 // pred_fallthru
      _
    %936 = vsyncpa [#allocation3], 1

</llo_original>
